<compile_context>
chip_gen: v5e
topology: v5e:2x2
jax: 0.10.0
libtpu: 0.0.40
codegen_flags: <defaults>
</compile_context>

<pallas_src>
import jax
import jax.numpy as jnp
from jax.experimental import pallas as pl
from jax.experimental.pallas import tpu as pltpu


def _round_up(v, m):
    return ((v + m - 1) // m) * m


def _vmem_capacity_bytes():
    """Per-TensorCore VMEM capacity; conservative fallback = v7x's 64 MiB."""
    try:
        info = pltpu.get_tpu_info()
        cap = getattr(info, "vmem_capacity_bytes", None)
        if cap:
            return int(cap)
    except Exception:
        pass
    return 64 << 20


def _choose_tiles(B, T, C, itemsize, vmem_cap_bytes):
    """Pick (batch_tile, t_tile) for the (batch, time) grid.

    Policy (per perf review): make per-step x tiles as large as safely fits (multi-MiB,
    to amortize the ~0.35 us/step overhead and hold the HBM roofline), capped at ~VMEM/8
    so double-buffering plus the f32 reduce temp stay comfortable on v7x's 64 MiB;
    always leave >= 2 batch steps (dual-TensorCore sharding on v7x); tile the time axis
    only when a full-T block of 8 batch rows would not fit.
    """
    max_tile_bytes = max(1 << 20, vmem_cap_bytes // 8)
    full_t_row_bytes = max(1, T * C * itemsize)
    rows_full_t = (max_tile_bytes // full_t_row_bytes) // 8 * 8
    if rows_full_t >= 8:
        # Whole T extent fits per block: tile only the batch axis.
        t_tile = T
        half_batch = _round_up(max(1, -(-B // 2)), 8)
        batch_tile = max(8, min(rows_full_t, half_batch))
    else:
        # Long-T / wide-C: keep 8 batch rows per block and tile the time axis instead.
        batch_tile = 8
        t_rows = (max_tile_bytes // max(1, 8 * C * itemsize)) // 8 * 8
        t_tile = max(8, min(t_rows, _round_up(T, 8)))
    return batch_tile, t_tile


def temporal_n_pooling(x, wc, bc, w1, b1, *, batch_tile=None, t_tile=None,
                       vmem_limit_bytes=None):
    """x: (B, T, C_in); wc: (C_in, F); bc: (1, F); w1: (F, OUT); b1: (1, OUT)."""
    B, T, C = x.shape
    Cw, F = wc.shape
    assert Cw == C, "conv weight / input channel mismatch"
    Fw, OUT = w1.shape
    assert Fw == F, "fc1 weight / feature mismatch"

    f32 = jnp.float32
    hi = jax.lax.Precision.HIGHEST

    # Fold conv1d(k=1) and the linear head into one (C, OUT) matmul + bias.
    # Exact because there is no nonlinearity between them in the module.
    W = jnp.dot(wc.astype(f32), w1.astype(f32), precision=hi)                   # (C, OUT)
    b = (jnp.dot(bc.reshape(1, F).astype(f32), w1.astype(f32), precision=hi)
         + b1.reshape(1, OUT).astype(f32))                                      # (1, OUT)

    # Lane-dense output head: pad OUT to a multiple of 128; slice outside the kernel.
    OUT_pad = _round_up(max(OUT, 1), 128)
    Wp = jnp.zeros((C, OUT_pad), f32).at[:, :OUT].set(W)
    bp = jnp.zeros((1, OUT_pad), f32).at[:, :OUT].set(b)

    vmem_cap = _vmem_capacity_bytes()
    auto_bt, auto_tt = _choose_tiles(B, T, C, x.dtype.itemsize, vmem_cap)
    if batch_tile is None:
        batch_tile = auto_bt
    if t_tile is None:
        t_tile = auto_tt

    n_t = -(-T // t_tile)
    T_pad = n_t * t_tile
    n_b = max(2, -(-B // batch_tile))          # >= 2 steps: pipelining + dual-TC (v7x)
    B_pad = n_b * batch_tile
    if (B_pad, T_pad) != (B, T):
        # Zero-padded time steps add nothing to the sum (mean uses the true T);
        # padded batch rows are sliced off below.
        x = jnp.pad(x, ((0, B_pad - B), (0, T_pad - T), (0, 0)))

    inv_t = 1.0 / float(T)                     # true T, not the padded extent

    def kernel(x_ref, w_ref, b_ref, o_ref, acc_ref):
        j = pl.program_id(1)

        @pl.when(j == 0)
        def _():
            acc_ref[...] = jnp.zeros_like(acc_ref)

        # Temporal sum accumulated in f32 without keeping a full f32 copy of the
        # (TB, t_tile, C) x tile live.
        acc_ref[...] += jnp.sum(x_ref[...], axis=1, dtype=jnp.float32)

        @pl.when(j == pl.num_programs(1) - 1)
        def _():
            pooled = acc_ref[...] * inv_t                                        # (TB, C)
            y = jnp.dot(pooled, w_ref[...],
                        preferred_element_type=jnp.float32) + b_ref[...]         # (TB, OUT_pad)
            o_ref[...] = y.astype(o_ref.dtype)

    if vmem_limit_bytes is None:
        x_tile_bytes = batch_tile * t_tile * C * x.dtype.itemsize
        out_tile_bytes = batch_tile * OUT_pad * 4
        weight_bytes = (C * OUT_pad + OUT_pad) * 4
        acc_bytes = batch_tile * C * 4
        reduce_tmp = batch_tile * t_tile * C * 4   # worst case if the cast isn't fused
        est = (2 * (x_tile_bytes + out_tile_bytes + weight_bytes)
               + acc_bytes + reduce_tmp + (2 << 20))
        vmem_limit_bytes = int(min(max(est, 16 << 20), (vmem_cap * 3) // 4))

    out = pl.pallas_call(
        kernel,
        out_shape=jax.ShapeDtypeStruct((B_pad, OUT_pad), jnp.float32),
        grid_spec=pltpu.PrefetchScalarGridSpec(
            num_scalar_prefetch=0,
            grid=(n_b, n_t),
            in_specs=[
                pl.BlockSpec((batch_tile, t_tile, C), lambda i, j: (i, j, 0)),
                pl.BlockSpec((C, OUT_pad), lambda i, j: (0, 0)),
                pl.BlockSpec((1, OUT_pad), lambda i, j: (0, 0)),
            ],
            out_specs=pl.BlockSpec((batch_tile, OUT_pad), lambda i, j: (i, 0)),
            scratch_shapes=[pltpu.VMEM((batch_tile, C), jnp.float32)],
        ),
        compiler_params=pltpu.CompilerParams(
            dimension_semantics=("parallel", "arbitrary"),
            vmem_limit_bytes=vmem_limit_bytes,
        ),
    )(x, Wp, bp)

    return out[:B, :OUT]


def reference(x, wc, bc, w1, b1):
    # Pure-JAX reference of the PyTorch forward (conv1d k=1 -> mean over T -> linear).
    xf = x.astype(jnp.float32)
    h = jnp.einsum("btc,cf->btf", xf, wc, precision=jax.lax.Precision.HIGHEST) + bc
    p = jnp.mean(h, axis=1)
    return jnp.dot(p, w1, precision=jax.lax.Precision.HIGHEST) + b1


if __name__ == "__main__":
    # Small shapes consistent with the module:
    #   data_length  -> sum = C_in = 256   (orig 1024+128=1152)
    #   feature_dim  -> F = 128            (orig 1152)
    #   class_length -> out_num = 64       (orig 29+285=314)
    B, T, C_IN, FEAT, OUT = 32, 16, 256, 128, 64

    key = jax.random.PRNGKey(0)
    kx, kwc, kbc, kw1, kb1 = jax.random.split(key, 5)

    # x is the HBM-bandwidth-dominant stream -> feed it as bf16; compute in f32.
    x = jax.random.normal(kx, (B, T, C_IN), dtype=jnp.float32).astype(jnp.bfloat16)
    wc = jax.random.normal(kwc, (C_IN, FEAT), dtype=jnp.float32) * (1.0 / C_IN ** 0.5)
    bc = jax.random.normal(kbc, (1, FEAT), dtype=jnp.float32) * 0.01
    w1 = jax.random.normal(kw1, (FEAT, OUT), dtype=jnp.float32) * (1.0 / FEAT ** 0.5)
    b1 = jax.random.normal(kb1, (1, OUT), dtype=jnp.float32) * 0.01

    out = jax.block_until_ready(temporal_n_pooling(x, wc, bc, w1, b1))
    ref = jax.block_until_ready(reference(x, wc, bc, w1, b1))

    assert out.shape == (B, OUT)
    max_err = float(jnp.max(jnp.abs(out - ref)))
    assert jnp.allclose(out, ref, atol=2e-3, rtol=2e-3), \
        f"mismatch vs reference (max abs err {max_err})"

    print("KERNEL_OK")
</pallas_src>

<mosaic_0001>
module attributes {stable_mosaic.version = 11 : i64} {
  func.func @kernel(%arg0: i32, %arg1: i32, %arg2: memref<16x16x256xbf16, #tpu.memory_space<vmem>>, %arg3: memref<256x128xf32, #tpu.memory_space<vmem>>, %arg4: memref<1x128xf32, #tpu.memory_space<vmem>>, %arg5: memref<16x128xf32, #tpu.memory_space<vmem>>, %arg6: memref<16x256xf32, #tpu.memory_space<vmem>>) attributes {dimension_semantics = [#tpu.dimension_semantics<parallel>, #tpu.dimension_semantics<arbitrary>], iteration_bounds = array<i64: 2, 1>, scalar_prefetch = 0 : i64, scratch_operands = 1 : i64, tpu.core_type = #tpu.core_type<tc>, window_params = [{transform_indices = @transform_0, window_bounds = array<i64: 16, 16, 256>}, {pipeline_mode = #tpu.pipeline_mode<synchronous>, transform_indices = @transform_1, window_bounds = array<i64: 256, 128>}, {pipeline_mode = #tpu.pipeline_mode<synchronous>, transform_indices = @transform_2, window_bounds = array<i64: 1, 128>}, {transform_indices = @transform_3, window_bounds = array<i64: 16, 128>}]} {
    %c0_i32 = arith.constant 0 : i32
    %0 = arith.cmpi eq, %arg1, %c0_i32 : i32
    %1 = arith.extui %0 : i1 to i32
    %c0_i32_0 = arith.constant 0 : i32
    %2 = arith.cmpi ne, %1, %c0_i32_0 : i32
    scf.if %2 {
      %cst_9 = arith.constant 0.000000e+00 : f32
      %12 = vector.broadcast %cst_9 : f32 to vector<16x256xf32>
      %c0_10 = arith.constant 0 : index
      %c0_11 = arith.constant 0 : index
      %13 = vector.load %arg6[%c0_10, %c0_11] : memref<16x256xf32, #tpu.memory_space<vmem>>, vector<16x256xf32>
      tpu.vector_store %arg6[%c0_10, %c0_11], %12 {strides = array<i32>} : memref<16x256xf32, #tpu.memory_space<vmem>>, vector<16x256xf32>,
    } else {
    }
    %c0 = arith.constant 0 : index
    %c0_1 = arith.constant 0 : index
    %3 = vector.load %arg6[%c0, %c0_1] : memref<16x256xf32, #tpu.memory_space<vmem>>, vector<16x256xf32>
    %c0_2 = arith.constant 0 : index
    %c0_3 = arith.constant 0 : index
    %c0_4 = arith.constant 0 : index
    %4 = vector.load %arg2[%c0_2, %c0_3, %c0_4] : memref<16x16x256xbf16, #tpu.memory_space<vmem>>, vector<16x16x256xbf16>
    %5 = arith.extf %4 : vector<16x16x256xbf16> to vector<16x16x256xf32>
    %cst = arith.constant dense<0.000000e+00> : vector<16x256xf32>
    %6 = vector.multi_reduction <add>, %5, %cst [1] : vector<16x16x256xf32> to vector<16x256xf32>
    %7 = arith.addf %3, %6 : vector<16x256xf32>
    %c0_5 = arith.constant 0 : index
    %c0_6 = arith.constant 0 : index
    %8 = vector.load %arg6[%c0_5, %c0_6] : memref<16x256xf32, #tpu.memory_space<vmem>>, vector<16x256xf32>
    tpu.vector_store %arg6[%c0_5, %c0_6], %7 {strides = array<i32>} : memref<16x256xf32, #tpu.memory_space<vmem>>, vector<16x256xf32>,
    %c0_i32_7 = arith.constant 0 : i32
    %9 = arith.cmpi eq, %arg1, %c0_i32_7 : i32
    %10 = arith.extui %9 : i1 to i32
    %c0_i32_8 = arith.constant 0 : i32
    %11 = arith.cmpi ne, %10, %c0_i32_8 : i32
    scf.if %11 {
      %c0_9 = arith.constant 0 : index
      %c0_10 = arith.constant 0 : index
      %12 = vector.load %arg6[%c0_9, %c0_10] : memref<16x256xf32, #tpu.memory_space<vmem>>, vector<16x256xf32>
      %cst_11 = arith.constant 6.250000e-02 : f32
      %13 = vector.broadcast %cst_11 : f32 to vector<16x256xf32>
      %14 = arith.mulf %12, %13 : vector<16x256xf32>
      %c0_12 = arith.constant 0 : index
      %c0_13 = arith.constant 0 : index
      %15 = vector.load %arg3[%c0_12, %c0_13] : memref<256x128xf32, #tpu.memory_space<vmem>>, vector<256x128xf32>
      %cst_14 = arith.constant dense<0.000000e+00> : vector<16x128xf32>
      %16 = tpu.matmul %14, %15, %cst_14 {dimension_numbers = #tpu.dot_dimension_numbers<[1], [0], [0], [1], [0, 0, 1, 1], [], []>} : vector<16x256xf32>, vector<256x128xf32>, vector<16x128xf32> -> vector<16x128xf32>
      %c0_15 = arith.constant 0 : index
      %c0_16 = arith.constant 0 : index
      %17 = vector.load %arg4[%c0_15, %c0_16] : memref<1x128xf32, #tpu.memory_space<vmem>>, vector<1x128xf32>
      %18 = vector.broadcast %17 : vector<1x128xf32> to vector<16x128xf32>
      %19 = arith.addf %16, %18 : vector<16x128xf32>
      %c0_17 = arith.constant 0 : index
      %c0_18 = arith.constant 0 : index
      %20 = vector.load %arg5[%c0_17, %c0_18] : memref<16x128xf32, #tpu.memory_space<vmem>>, vector<16x128xf32>
      tpu.vector_store %arg5[%c0_17, %c0_18], %19 {strides = array<i32>} : memref<16x128xf32, #tpu.memory_space<vmem>>, vector<16x128xf32>,
    } else {
    }
    return
  }
  func.func @transform_0(%arg0: i32, %arg1: i32) -> (i32, i32, i32) {
    %c0_i32 = arith.constant 0 : i32
    %c0_i32_0 = arith.constant 0 : i32
    return %arg0, %arg1, %c0_i32 : i32, i32, i32
  }
  func.func @transform_1(%arg0: i32, %arg1: i32) -> (i32, i32) {
    %c0_i32 = arith.constant 0 : i32
    %c0_i32_0 = arith.constant 0 : i32
    %c0_i32_1 = arith.constant 0 : i32
    return %c0_i32, %c0_i32_0 : i32, i32
  }
  func.func @transform_2(%arg0: i32, %arg1: i32) -> (i32, i32) {
    %c0_i32 = arith.constant 0 : i32
    %c0_i32_0 = arith.constant 0 : i32
    %c0_i32_1 = arith.constant 0 : i32
    return %c0_i32, %c0_i32_0 : i32, i32
  }
  func.func @transform_3(%arg0: i32, %arg1: i32) -> (i32, i32) {
    %c0_i32 = arith.constant 0 : i32
    %c0_i32_0 = arith.constant 0 : i32
    return %arg0, %c0_i32 : i32, i32
  }
}

</mosaic_0001>

<llo_original>
// kernel: tpu_custom_call.1
$region0: #{tpu_custom_call.1}
  #allocation0 [shape = 'u32[]', space=smem, size = 0x4, offset = 0x4, fixed_abs, tag = 'smem constant byte address 0x4 - core index']
  #allocation1 [shape = 'u32[72,128]{1,0:T(1,128)}', space=vmem, size = 0x9000, scoped, tag = 'internal scratch']
  #allocation2 [shape = 'f32[16,256]{1,0:T(8,128)}', space=vmem, size = 0x4000, scoped, tag = 'scratch operand']
  %s0 = inlined_call_operand.hbm [shape: bf16[32,16,256], index: 0, kind: input, shape index: {}]
  %s1 = inlined_call_operand.hbm [shape: f32[256,128], index: 1, kind: input, shape index: {}]
  %s2 = inlined_call_operand.vmem [shape: f32[1,128], index: 2, kind: input, shape index: {}]
  %s3 = inlined_call_operand.hbm [shape: f32[32,128], index: 3, kind: output, shape index: {}]
  %s4 = sld [smem:[#allocation0]]
  $region61: #{tpu_custom_call.1} parent=0
    _
  %s6 = ssub.s32 1, %s4
  %s7 = scalar_select 0, %s6, %s4
  $region1: #{tpu_custom_call.1} parent=0
    #allocation3 [shape = 'u8[262144]{0}', space=vmem, size = 0x40000, scoped, tag = 'input window, operand 0']
    #allocation4 [shape = 's32[2]{0}', space=sflag, size = 0x8, scoped, tag = 'scoped memory for tpu_custom_call.1']
    #allocation5 [shape = 's32[2]{0}', space=sflag, size = 0x8, scoped, tag = 'scoped memory for tpu_custom_call.1']
    #allocation6 [shape = 'u8[131072]{0}', space=vmem, size = 0x20000, scoped, tag = 'input window, operand 1, single buffered']
    #allocation7 [shape = 's32[1]{0}', space=sflag, size = 0x4, scoped, tag = 'scoped memory for tpu_custom_call.1']
    #allocation8 [shape = 'u8[16384]{0}', space=vmem, size = 0x4000, scoped, tag = 'output window, operand 0']
    %8 = vsyncpa [#allocation4], 0
    %s9 = scalar_lea.sflag [#allocation4], 1
    %10 = vsyncpa %s9, 0
    %11 = vsyncpa [#allocation7], 0
    %12 = vsyncpa [#allocation5], 0
    %s13 = scalar_lea.sflag [#allocation5], 1
    %14 = vsyncpa %s13, 0
    loop: start=0, step=1, limit=4
    $region2: #{tpu_custom_call.1} parent=1 // loop_pre_header
      _
    $region3: #{tpu_custom_call.1} parent=1 // loop_header
      %s16 = sphi 0, %s20
      %p17 = scmp.ge.s32.totalorder %s16, 4
      %s23 = sphi 0, %s35
      %s24 = sphi 0, %s31
      %s25 = sphi 0, %s23
      %s26 = sphi 0, %s24
      %s27 = sphi 0, %s25
      %s28 = sphi 0, %s26
      %s40 = sphi 0, %s42
      %s43 = sphi 0, %s40
      %s44 = sphi 0, %s43
      %s60 = sphi 0, %s44
      %s64 = sphi 0, %s64
      %s66 = sphi 0, %s64
      %s67 = sphi 0, %s66
      %s81 = sphi 0, %s67
      %s85 = sphi 0, %s85
      %s87 = sphi 0, %s85
      %s88 = sphi 0, %s87
      %s102 = sphi 0, %s88
      %s108 = sphi 0, %s110
      %s111 = sphi 0, %s108
      %s112 = sphi 0, %s111
      %s128 = sphi 0, %s112
    $region4: #{tpu_custom_call.1} parent=1 // loop_header_branch
      %19 = sbr.rel (%p17) target = $region8
    $region5: #{tpu_custom_call.1} parent=1 // loop_body
      %s21 = ssub.s32 %s16, 1
      %s22 = ssub.s32 %s16, 2
      %s29 = sadd.s32 1, %s24
      %p30 = scmp.ge.s32.totalorder %s29, 1
      %s31 = scalar_select %p30, 0, %s29
      %s32 = sadd.s32 1, %s23
      %s33 = scalar_select %p30, %s32, %s23
      %p34 = scmp.ge.s32.totalorder %s33, 2
      %s35 = scalar_select %p34, 0, %s33
      %s36 = ssub.s32 %s23, %s35
      %s37 = ssub.s32 %s24, %s31
      %s38 = sor.u32 %s36, %s37
      %p39 = scmp.eq.s32.totalorder %s38, 0
      %s41 = sadd.s32 %s40, 1
      %s42 = scalar_select %p39, %s40, %s41
      %p45 = pneg %p39
      %p46 = scmp.eq.s32.totalorder %s16, 1
      %p47 = por %p45, %p46
      %p48 = scmp.ne.s32.totalorder %s40, %s43
      %p49 = scmp.eq.s32.totalorder %s16, 0
      %p50 = por %p48, %p49
      %p51 = scmp.ne.s32.totalorder %s40, %s43
      %p52 = scmp.eq.s32.totalorder %s21, 1
      %p53 = por %p51, %p52
      %p54 = scmp.ne.s32.totalorder %s43, %s44
      %p55 = scmp.eq.s32.totalorder %s21, 0
      %p56 = por %p54, %p55
      %p57 = scmp.ne.s32.totalorder %s43, %s44
      %p58 = scmp.eq.s32.totalorder %s22, 1
      %p59 = por %p57, %p58
      %p61 = scmp.ne.s32.totalorder %s44, %s60
      %p62 = scmp.eq.s32.totalorder %s22, 0
      %p63 = por %p61, %p62
      %s65 = sadd.s32 %s64, 1
      %p68 = scmp.eq.s32.totalorder %s16, 1
      %p69 = scmp.ne.s32.totalorder %s64, %s66
      %p70 = scmp.eq.s32.totalorder %s16, 0
      %p71 = por %p69, %p70
      %p72 = scmp.ne.s32.totalorder %s64, %s66
      %p73 = scmp.eq.s32.totalorder %s21, 1
      %p74 = por %p72, %p73
      %p75 = scmp.ne.s32.totalorder %s66, %s67
      %p76 = scmp.eq.s32.totalorder %s21, 0
      %p77 = por %p75, %p76
      %p78 = scmp.ne.s32.totalorder %s66, %s67
      %p79 = scmp.eq.s32.totalorder %s22, 1
      %p80 = por %p78, %p79
      %p82 = scmp.ne.s32.totalorder %s67, %s81
      %p83 = scmp.eq.s32.totalorder %s22, 0
      %p84 = por %p82, %p83
      %s86 = sadd.s32 %s85, 1
      %p89 = scmp.eq.s32.totalorder %s16, 1
      %p90 = scmp.ne.s32.totalorder %s85, %s87
      %p91 = scmp.eq.s32.totalorder %s16, 0
      %p92 = por %p90, %p91
      %p93 = scmp.ne.s32.totalorder %s85, %s87
      %p94 = scmp.eq.s32.totalorder %s21, 1
      %p95 = por %p93, %p94
      %p96 = scmp.ne.s32.totalorder %s87, %s88
      %p97 = scmp.eq.s32.totalorder %s21, 0
      %p98 = por %p96, %p97
      %p99 = scmp.ne.s32.totalorder %s87, %s88
      %p100 = scmp.eq.s32.totalorder %s22, 1
      %p101 = por %p99, %p100
      %p103 = scmp.ne.s32.totalorder %s88, %s102
      %p104 = scmp.eq.s32.totalorder %s22, 0
      %p105 = por %p103, %p104
      %s106 = ssub.s32 %s23, %s35
      %p107 = scmp.eq.s32.totalorder %s106, 0
      %s109 = sadd.s32 %s108, 1
      %s110 = scalar_select %p107, %s108, %s109
      %p113 = pneg %p107
      %p114 = scmp.eq.s32.totalorder %s16, 1
      %p115 = por %p113, %p114
      %p116 = scmp.ne.s32.totalorder %s108, %s111
      %p117 = scmp.eq.s32.totalorder %s16, 0
      %p118 = por %p116, %p117
      %p119 = scmp.ne.s32.totalorder %s108, %s111
      %p120 = scmp.eq.s32.totalorder %s21, 1
      %p121 = por %p119, %p120
      %p122 = scmp.ne.s32.totalorder %s111, %s112
      %p123 = scmp.eq.s32.totalorder %s21, 0
      %p124 = por %p122, %p123
      %p125 = scmp.ne.s32.totalorder %s111, %s112
      %p126 = scmp.eq.s32.totalorder %s22, 1
      %p127 = por %p125, %p126
      %p129 = scmp.ne.s32.totalorder %s112, %s128
      %p130 = scmp.eq.s32.totalorder %s22, 0
      %p131 = por %p129, %p130
      %p132 = scmp.le.s32.totalorder 1, %s16
      %p133 = scmp.lt.s32.totalorder %s16, 3
      %p134 = pnand %p132, %p133
      %p135 = pneg %p134
      // Predicated region
      $region9: #{tpu_custom_call.1} parent=5 // pred_check
        _
      $region10: #{tpu_custom_call.1} parent=5 // pred_check_branch
        %137 = sbr.rel (%p134) target = $region12
      $region11: #{tpu_custom_call.1} parent=5 // pred_region
        %s138 = ssub.s32 %s16, 1
        // Predicated region
        $region13: #{tpu_custom_call.1} parent=11 // pred_check
          %p139 = pneg %p77
        $region14: #{tpu_custom_call.1} parent=11 // pred_check_branch
          %141 = sbr.rel (%p139) target = $region16
        $region15: #{tpu_custom_call.1} parent=11 // pred_region
          %143 = vsyncadd [#allocation7], 0
          %s144 = sshll.u32 %s1, 4
          %s145 = int_to_ptr.hbm [resolvable:$true] %s144
          %s146 = sshll.u32 [#allocation6], 4
          %s147 = int_to_ptr.vmem [resolvable:$true] %s146
          %152 = dma.hbm_to_vmem [thread:$0]  %s145, 4096, %s147, [#allocation7], 128, 128, 8
        $region16: #{tpu_custom_call.1} parent=11 // pred_fallthru
          _
        // Predicated region
        $region17: #{tpu_custom_call.1} parent=11 // pred_check
          %p153 = pneg %p98
        $region18: #{tpu_custom_call.1} parent=11 // pred_check_branch
          %155 = sbr.rel (%p153) target = $region20
        $region19: #{tpu_custom_call.1} parent=11 // pred_region
          _
        $region20: #{tpu_custom_call.1} parent=11 // pred_fallthru
          _
      $region12: #{tpu_custom_call.1} parent=5 // pred_fallthru
        _
      %p156 = scmp.lt.s32.totalorder %s16, 2
      // Predicated region
      $region21: #{tpu_custom_call.1} parent=5 // pred_check
        %p157 = pneg %p156
      $region22: #{tpu_custom_call.1} parent=5 // pred_check_branch
        %159 = sbr.rel (%p157) target = $region24
      $region23: #{tpu_custom_call.1} parent=5 // pred_region
        // Predicated region
        $region25: #{tpu_custom_call.1} parent=23 // pred_check
          %p160 = pneg %p50
        $region26: #{tpu_custom_call.1} parent=23 // pred_check_branch
          %162 = sbr.rel (%p160) target = $region28
        $region27: #{tpu_custom_call.1} parent=23 // pred_region
          %s163 = sand.u32 %s40, 1
          %s164 = scalar_lea.sflag [#allocation4], %s163
          %s165 = sand.u32 %s40, 1
          %s166 = smul.addr %s165, 256
          %s167 = scalar_lea.vmem [#allocation3], %s166
          %s168 = smul.u32 16, %s23
          %s169 = smul.u32 2, %s24
          %171 = vsyncadd %s164, 0
          %s172 = smul.addr %s169, 2
          %s173 = smul.addr %s168, 4
          %s174 = sadd.s32 %s172, %s173
          %s175 = smul.addr %s174, 4
          %s176 = scalar_lea.hbm %s0, %s175
          %s177 = sshll.u32 %s176, 4
          %s178 = int_to_ptr.hbm [resolvable:$true] %s177
          %s179 = sshll.u32 %s167, 4
          %s180 = int_to_ptr.vmem [resolvable:$true] %s179
          %185 = dma.hbm_to_vmem [thread:$0]  %s178, 4096, %s180, %s164, 128, 128, 8
        $region28: #{tpu_custom_call.1} parent=23 // pred_fallthru
          _
      $region24: #{tpu_custom_call.1} parent=5 // pred_fallthru
        _
      %p186 = scmp.le.s32.totalorder 1, %s16
      %p187 = scmp.lt.s32.totalorder %s16, 3
      %p188 = pnand %p186, %p187
      %p189 = pneg %p188
      // Predicated region
      $region29: #{tpu_custom_call.1} parent=5 // pred_check
        _
      $region30: #{tpu_custom_call.1} parent=5 // pred_check_branch
        %191 = sbr.rel (%p188) target = $region32
      $region31: #{tpu_custom_call.1} parent=5 // pred_region
        %s192 = ssub.s32 %s16, 1
        %s193 = sand.u32 %s43, 1
        %s194 = scalar_lea.sflag [#allocation4], %s193
        %s195 = sand.u32 %s43, 1
        %s196 = smul.addr %s195, 256
        %s197 = scalar_lea.vmem [#allocation3], %s196
        // Predicated region
        $region33: #{tpu_custom_call.1} parent=31 // pred_check
          %p198 = pneg %p56
        $region34: #{tpu_custom_call.1} parent=31 // pred_check_branch
          %200 = sbr.rel (%p198) target = $region36
        $region35: #{tpu_custom_call.1} parent=31 // pred_region
          %202 = dma.done %s194, 4096
        $region36: #{tpu_custom_call.1} parent=31 // pred_fallthru
          _
        // Predicated region
        $region37: #{tpu_custom_call.1} parent=31 // pred_check
          %p203 = pneg %p77
        $region38: #{tpu_custom_call.1} parent=31 // pred_check_branch
          %205 = sbr.rel (%p203) target = $region40
        $region39: #{tpu_custom_call.1} parent=31 // pred_region
          %207 = dma.done [#allocation7], 4096
        $region40: #{tpu_custom_call.1} parent=31 // pred_fallthru
          _
        %s208 = sand.u32 %s43, 1
        %s209 = scalar_lea.sflag [#allocation4], %s208
        %s210 = sand.u32 %s43, 1
        %s211 = smul.addr %s210, 256
        %s212 = scalar_lea.vmem [#allocation3], %s211
        %p213 = pneg %p56
        %p214 = pneg %p53
        %p215 = pneg %p77
        %p216 = pneg %p74
        %p217 = pneg %p98
        %p218 = pneg %p95
        %p219 = pneg %p124
        %p220 = pneg %p121
        %s221 = sand.u32 %s111, 1
        %s222 = scalar_lea.sflag [#allocation5], %s221
        %s223 = sand.u32 %s111, 1
        %s224 = smul.addr %s223, 16
        %s225 = scalar_lea.vmem [#allocation8], %s224
        %s226 = smul.u32 16, %s25
        %s227 = smul.u32 2, %s26
        %s228 = smul.u32 2, %s25
        %p229 = scmp.eq.s32.totalorder %s26, 0
        // Predicated region
        $region41: #{tpu_custom_call.1} parent=31 // pred_check
          %p230 = pneg %p229
        $region42: #{tpu_custom_call.1} parent=31 // pred_check_branch
          %232 = sbr.rel (%p230) target = $region44
        $region43: #{tpu_custom_call.1} parent=31 // pred_region
          %233 = vst [vmem:[#allocation2] sm:$0xff] 0.0
          %234 = vst [vmem:[#allocation2 + $0x8] sm:$0xff] 0.0
          %235 = vst [vmem:[#allocation2 + $0x10] sm:$0xff] 0.0
          %236 = vst [vmem:[#allocation2 + $0x18] sm:$0xff] 0.0
        $region44: #{tpu_custom_call.1} parent=31 // pred_fallthru
          _
        %v237 = vld [vmem:[#allocation2] sm:$0xff]
        %v238 = vld [vmem:[#allocation2 + $0x8] sm:$0xff]
        %v239 = vld [vmem:[#allocation2 + $0x10] sm:$0xff]
        %v240 = vld [vmem:[#allocation2 + $0x18] sm:$0xff]
        %v241 = vld [vmem:[%s197] sm:$0xff]
        %v242 = vld [vmem:[%s197 + $0x8] sm:$0xff]
        %v243 = vld [vmem:[%s197 + $0x10] sm:$0xff]
        %v244 = vld [vmem:[%s197 + $0x18] sm:$0xff]
        %v245 = vld [vmem:[%s197 + $0x20] sm:$0xff]
        %v246 = vld [vmem:[%s197 + $0x28] sm:$0xff]
        %v247 = vld [vmem:[%s197 + $0x30] sm:$0xff]
        %v248 = vld [vmem:[%s197 + $0x38] sm:$0xff]
        %v249 = vld [vmem:[%s197 + $0x40] sm:$0xff]
        %v250 = vld [vmem:[%s197 + $0x48] sm:$0xff]
        %v251 = vld [vmem:[%s197 + $0x50] sm:$0xff]
        %v252 = vld [vmem:[%s197 + $0x58] sm:$0xff]
        %v253 = vld [vmem:[%s197 + $0x60] sm:$0xff]
        %v254 = vld [vmem:[%s197 + $0x68] sm:$0xff]
        %v255 = vld [vmem:[%s197 + $0x70] sm:$0xff]
        %v256 = vld [vmem:[%s197 + $0x78] sm:$0xff]
        %v257 = vld [vmem:[%s197 + $0x80] sm:$0xff]
        %v258 = vld [vmem:[%s197 + $0x88] sm:$0xff]
        %v259 = vld [vmem:[%s197 + $0x90] sm:$0xff]
        %v260 = vld [vmem:[%s197 + $0x98] sm:$0xff]
        %v261 = vld [vmem:[%s197 + $0xa0] sm:$0xff]
        %v262 = vld [vmem:[%s197 + $0xa8] sm:$0xff]
        %v263 = vld [vmem:[%s197 + $0xb0] sm:$0xff]
        %v264 = vld [vmem:[%s197 + $0xb8] sm:$0xff]
        %v265 = vld [vmem:[%s197 + $0xc0] sm:$0xff]
        %v266 = vld [vmem:[%s197 + $0xc8] sm:$0xff]
        %v267 = vld [vmem:[%s197 + $0xd0] sm:$0xff]
        %v268 = vld [vmem:[%s197 + $0xd8] sm:$0xff]
        %v269 = vld [vmem:[%s197 + $0xe0] sm:$0xff]
        %v270 = vld [vmem:[%s197 + $0xe8] sm:$0xff]
        %v271 = vld [vmem:[%s197 + $0xf0] sm:$0xff]
        %v272 = vld [vmem:[%s197 + $0xf8] sm:$0xff]
        %v273 = vunpack.c.l.bf16 %v241
        %v274 = vunpack.c.h.bf16 %v241
        %v275 = vunpack.c.l.bf16 %v242
        %v276 = vunpack.c.h.bf16 %v242
        %v277 = vunpack.c.l.bf16 %v243
        %v278 = vunpack.c.h.bf16 %v243
        %v279 = vunpack.c.l.bf16 %v244
        %v280 = vunpack.c.h.bf16 %v244
        %v281 = vunpack.c.l.bf16 %v245
        %v282 = vunpack.c.h.bf16 %v245
        %v283 = vunpack.c.l.bf16 %v246
        %v284 = vunpack.c.h.bf16 %v246
        %v285 = vunpack.c.l.bf16 %v247
        %v286 = vunpack.c.h.bf16 %v247
        %v287 = vunpack.c.l.bf16 %v248
        %v288 = vunpack.c.h.bf16 %v248
        %v289 = vunpack.c.l.bf16 %v249
        %v290 = vunpack.c.h.bf16 %v249
        %v291 = vunpack.c.l.bf16 %v250
        %v292 = vunpack.c.h.bf16 %v250
        %v293 = vunpack.c.l.bf16 %v251
        %v294 = vunpack.c.h.bf16 %v251
        %v295 = vunpack.c.l.bf16 %v252
        %v296 = vunpack.c.h.bf16 %v252
        %v297 = vunpack.c.l.bf16 %v253
        %v298 = vunpack.c.h.bf16 %v253
        %v299 = vunpack.c.l.bf16 %v254
        %v300 = vunpack.c.h.bf16 %v254
        %v301 = vunpack.c.l.bf16 %v255
        %v302 = vunpack.c.h.bf16 %v255
        %v303 = vunpack.c.l.bf16 %v256
        %v304 = vunpack.c.h.bf16 %v256
        %v305 = vunpack.c.l.bf16 %v257
        %v306 = vunpack.c.h.bf16 %v257
        %v307 = vunpack.c.l.bf16 %v258
        %v308 = vunpack.c.h.bf16 %v258
        %v309 = vunpack.c.l.bf16 %v259
        %v310 = vunpack.c.h.bf16 %v259
        %v311 = vunpack.c.l.bf16 %v260
        %v312 = vunpack.c.h.bf16 %v260
        %v313 = vunpack.c.l.bf16 %v261
        %v314 = vunpack.c.h.bf16 %v261
        %v315 = vunpack.c.l.bf16 %v262
        %v316 = vunpack.c.h.bf16 %v262
        %v317 = vunpack.c.l.bf16 %v263
        %v318 = vunpack.c.h.bf16 %v263
        %v319 = vunpack.c.l.bf16 %v264
        %v320 = vunpack.c.h.bf16 %v264
        %v321 = vunpack.c.l.bf16 %v265
        %v322 = vunpack.c.h.bf16 %v265
        %v323 = vunpack.c.l.bf16 %v266
        %v324 = vunpack.c.h.bf16 %v266
        %v325 = vunpack.c.l.bf16 %v267
        %v326 = vunpack.c.h.bf16 %v267
        %v327 = vunpack.c.l.bf16 %v268
        %v328 = vunpack.c.h.bf16 %v268
        %v329 = vunpack.c.l.bf16 %v269
        %v330 = vunpack.c.h.bf16 %v269
        %v331 = vunpack.c.l.bf16 %v270
        %v332 = vunpack.c.h.bf16 %v270
        %v333 = vunpack.c.l.bf16 %v271
        %v334 = vunpack.c.h.bf16 %v271
        %v335 = vunpack.c.l.bf16 %v272
        %v336 = vunpack.c.h.bf16 %v272
        %v337 = vadd.f32 %v273, %v275
        %v338 = vrot.slane %v337, 4
        %v339 = vadd.f32 %v337, %v338
        %v340 = vrot.slane %v339, 2
        %v341 = vadd.f32 %v339, %v340
        %v342 = vrot.slane %v341, 1
        %v343 = vadd.f32 %v341, %v342
        %v344 = vadd.f32 %v274, %v276
        %v345 = vrot.slane %v344, 4
        %v346 = vadd.f32 %v344, %v345
        %v347 = vrot.slane %v346, 2
        %v348 = vadd.f32 %v346, %v347
        %v349 = vrot.slane %v348, 1
        %v350 = vadd.f32 %v348, %v349
        %v351 = vadd.f32 %v277, %v279
        %v352 = vrot.slane %v351, 4
        %v353 = vadd.f32 %v351, %v352
        %v354 = vrot.slane %v353, 2
        %v355 = vadd.f32 %v353, %v354
        %v356 = vrot.slane %v355, 1
        %v357 = vadd.f32 %v355, %v356
        %v358 = vadd.f32 %v278, %v280
        %v359 = vrot.slane %v358, 4
        %v360 = vadd.f32 %v358, %v359
        %v361 = vrot.slane %v360, 2
        %v362 = vadd.f32 %v360, %v361
        %v363 = vrot.slane %v362, 1
        %v364 = vadd.f32 %v362, %v363
        %v365 = vadd.f32 %v281, %v283
        %v366 = vrot.slane %v365, 4
        %v367 = vadd.f32 %v365, %v366
        %v368 = vrot.slane %v367, 2
        %v369 = vadd.f32 %v367, %v368
        %v370 = vrot.slane %v369, 1
        %v371 = vadd.f32 %v369, %v370
        %v372 = vadd.f32 %v282, %v284
        %v373 = vrot.slane %v372, 4
        %v374 = vadd.f32 %v372, %v373
        %v375 = vrot.slane %v374, 2
        %v376 = vadd.f32 %v374, %v375
        %v377 = vrot.slane %v376, 1
        %v378 = vadd.f32 %v376, %v377
        %v379 = vadd.f32 %v285, %v287
        %v380 = vrot.slane %v379, 4
        %v381 = vadd.f32 %v379, %v380
        %v382 = vrot.slane %v381, 2
        %v383 = vadd.f32 %v381, %v382
        %v384 = vrot.slane %v383, 1
        %v385 = vadd.f32 %v383, %v384
        %v386 = vadd.f32 %v286, %v288
        %v387 = vrot.slane %v386, 4
        %v388 = vadd.f32 %v386, %v387
        %v389 = vrot.slane %v388, 2
        %v390 = vadd.f32 %v388, %v389
        %v391 = vrot.slane %v390, 1
        %v392 = vadd.f32 %v390, %v391
        %v393 = vadd.f32 %v289, %v291
        %v394 = vrot.slane %v393, 4
        %v395 = vadd.f32 %v393, %v394
        %v396 = vrot.slane %v395, 2
        %v397 = vadd.f32 %v395, %v396
        %v398 = vrot.slane %v397, 1
        %v399 = vadd.f32 %v397, %v398
        %v400 = vadd.f32 %v290, %v292
        %v401 = vrot.slane %v400, 4
        %v402 = vadd.f32 %v400, %v401
        %v403 = vrot.slane %v402, 2
        %v404 = vadd.f32 %v402, %v403
        %v405 = vrot.slane %v404, 1
        %v406 = vadd.f32 %v404, %v405
        %v407 = vadd.f32 %v293, %v295
        %v408 = vrot.slane %v407, 4
        %v409 = vadd.f32 %v407, %v408
        %v410 = vrot.slane %v409, 2
        %v411 = vadd.f32 %v409, %v410
        %v412 = vrot.slane %v411, 1
        %v413 = vadd.f32 %v411, %v412
        %v414 = vadd.f32 %v294, %v296
        %v415 = vrot.slane %v414, 4
        %v416 = vadd.f32 %v414, %v415
        %v417 = vrot.slane %v416, 2
        %v418 = vadd.f32 %v416, %v417
        %v419 = vrot.slane %v418, 1
        %v420 = vadd.f32 %v418, %v419
        %v421 = vadd.f32 %v297, %v299
        %v422 = vrot.slane %v421, 4
        %v423 = vadd.f32 %v421, %v422
        %v424 = vrot.slane %v423, 2
        %v425 = vadd.f32 %v423, %v424
        %v426 = vrot.slane %v425, 1
        %v427 = vadd.f32 %v425, %v426
        %v428 = vadd.f32 %v298, %v300
        %v429 = vrot.slane %v428, 4
        %v430 = vadd.f32 %v428, %v429
        %v431 = vrot.slane %v430, 2
        %v432 = vadd.f32 %v430, %v431
        %v433 = vrot.slane %v432, 1
        %v434 = vadd.f32 %v432, %v433
        %v435 = vadd.f32 %v301, %v303
        %v436 = vrot.slane %v435, 4
        %v437 = vadd.f32 %v435, %v436
        %v438 = vrot.slane %v437, 2
        %v439 = vadd.f32 %v437, %v438
        %v440 = vrot.slane %v439, 1
        %v441 = vadd.f32 %v439, %v440
        %v442 = vadd.f32 %v302, %v304
        %v443 = vrot.slane %v442, 4
        %v444 = vadd.f32 %v442, %v443
        %v445 = vrot.slane %v444, 2
        %v446 = vadd.f32 %v444, %v445
        %v447 = vrot.slane %v446, 1
        %v448 = vadd.f32 %v446, %v447
        %v449 = vadd.f32 %v305, %v307
        %v450 = vrot.slane %v449, 4
        %v451 = vadd.f32 %v449, %v450
        %v452 = vrot.slane %v451, 2
        %v453 = vadd.f32 %v451, %v452
        %v454 = vrot.slane %v453, 1
        %v455 = vadd.f32 %v453, %v454
        %v456 = vadd.f32 %v306, %v308
        %v457 = vrot.slane %v456, 4
        %v458 = vadd.f32 %v456, %v457
        %v459 = vrot.slane %v458, 2
        %v460 = vadd.f32 %v458, %v459
        %v461 = vrot.slane %v460, 1
        %v462 = vadd.f32 %v460, %v461
        %v463 = vadd.f32 %v309, %v311
        %v464 = vrot.slane %v463, 4
        %v465 = vadd.f32 %v463, %v464
        %v466 = vrot.slane %v465, 2
        %v467 = vadd.f32 %v465, %v466
        %v468 = vrot.slane %v467, 1
        %v469 = vadd.f32 %v467, %v468
        %v470 = vadd.f32 %v310, %v312
        %v471 = vrot.slane %v470, 4
        %v472 = vadd.f32 %v470, %v471
        %v473 = vrot.slane %v472, 2
        %v474 = vadd.f32 %v472, %v473
        %v475 = vrot.slane %v474, 1
        %v476 = vadd.f32 %v474, %v475
        %v477 = vadd.f32 %v313, %v315
        %v478 = vrot.slane %v477, 4
        %v479 = vadd.f32 %v477, %v478
        %v480 = vrot.slane %v479, 2
        %v481 = vadd.f32 %v479, %v480
        %v482 = vrot.slane %v481, 1
        %v483 = vadd.f32 %v481, %v482
        %v484 = vadd.f32 %v314, %v316
        %v485 = vrot.slane %v484, 4
        %v486 = vadd.f32 %v484, %v485
        %v487 = vrot.slane %v486, 2
        %v488 = vadd.f32 %v486, %v487
        %v489 = vrot.slane %v488, 1
        %v490 = vadd.f32 %v488, %v489
        %v491 = vadd.f32 %v317, %v319
        %v492 = vrot.slane %v491, 4
        %v493 = vadd.f32 %v491, %v492
        %v494 = vrot.slane %v493, 2
        %v495 = vadd.f32 %v493, %v494
        %v496 = vrot.slane %v495, 1
        %v497 = vadd.f32 %v495, %v496
        %v498 = vadd.f32 %v318, %v320
        %v499 = vrot.slane %v498, 4
        %v500 = vadd.f32 %v498, %v499
        %v501 = vrot.slane %v500, 2
        %v502 = vadd.f32 %v500, %v501
        %v503 = vrot.slane %v502, 1
        %v504 = vadd.f32 %v502, %v503
        %v505 = vadd.f32 %v321, %v323
        %v506 = vrot.slane %v505, 4
        %v507 = vadd.f32 %v505, %v506
        %v508 = vrot.slane %v507, 2
        %v509 = vadd.f32 %v507, %v508
        %v510 = vrot.slane %v509, 1
        %v511 = vadd.f32 %v509, %v510
        %v512 = vadd.f32 %v322, %v324
        %v513 = vrot.slane %v512, 4
        %v514 = vadd.f32 %v512, %v513
        %v515 = vrot.slane %v514, 2
        %v516 = vadd.f32 %v514, %v515
        %v517 = vrot.slane %v516, 1
        %v518 = vadd.f32 %v516, %v517
        %v519 = vadd.f32 %v325, %v327
        %v520 = vrot.slane %v519, 4
        %v521 = vadd.f32 %v519, %v520
        %v522 = vrot.slane %v521, 2
        %v523 = vadd.f32 %v521, %v522
        %v524 = vrot.slane %v523, 1
        %v525 = vadd.f32 %v523, %v524
        %v526 = vadd.f32 %v326, %v328
        %v527 = vrot.slane %v526, 4
        %v528 = vadd.f32 %v526, %v527
        %v529 = vrot.slane %v528, 2
        %v530 = vadd.f32 %v528, %v529
        %v531 = vrot.slane %v530, 1
        %v532 = vadd.f32 %v530, %v531
        %v533 = vadd.f32 %v329, %v331
        %v534 = vrot.slane %v533, 4
        %v535 = vadd.f32 %v533, %v534
        %v536 = vrot.slane %v535, 2
        %v537 = vadd.f32 %v535, %v536
        %v538 = vrot.slane %v537, 1
        %v539 = vadd.f32 %v537, %v538
        %v540 = vadd.f32 %v330, %v332
        %v541 = vrot.slane %v540, 4
        %v542 = vadd.f32 %v540, %v541
        %v543 = vrot.slane %v542, 2
        %v544 = vadd.f32 %v542, %v543
        %v545 = vrot.slane %v544, 1
        %v546 = vadd.f32 %v544, %v545
        %v547 = vadd.f32 %v333, %v335
        %v548 = vrot.slane %v547, 4
        %v549 = vadd.f32 %v547, %v548
        %v550 = vrot.slane %v549, 2
        %v551 = vadd.f32 %v549, %v550
        %v552 = vrot.slane %v551, 1
        %v553 = vadd.f32 %v551, %v552
        %v554 = vadd.f32 %v334, %v336
        %v555 = vrot.slane %v554, 4
        %v556 = vadd.f32 %v554, %v555
        %v557 = vrot.slane %v556, 2
        %v558 = vadd.f32 %v556, %v557
        %v559 = vrot.slane %v558, 1
        %v560 = vadd.f32 %v558, %v559
        %vm593 = vcmask 1041409
        %v594 = vsel %vm593, %v357, %v343
        %vm595 = vcmask 1042434
        %v596 = vsel %vm595, %v371, %v594
        %vm597 = vcmask 1043459
        %v598 = vsel %vm597, %v385, %v596
        %vm599 = vcmask 1044484
        %v600 = vsel %vm599, %v399, %v598
        %vm601 = vcmask 1045509
        %v602 = vsel %vm601, %v413, %v600
        %vm603 = vcmask 1046534
        %v604 = vsel %vm603, %v427, %v602
        %vm605 = vcmask 1047559
        %v606 = vsel %vm605, %v441, %v604
        %v607 = vsel %vm593, %v364, %v350
        %v608 = vsel %vm595, %v378, %v607
        %v609 = vsel %vm597, %v392, %v608
        %v610 = vsel %vm599, %v406, %v609
        %v611 = vsel %vm601, %v420, %v610
        %v612 = vsel %vm603, %v434, %v611
        %v613 = vsel %vm605, %v448, %v612
        %v614 = vsel %vm593, %v469, %v455
        %v615 = vsel %vm595, %v483, %v614
        %v616 = vsel %vm597, %v497, %v615
        %v617 = vsel %vm599, %v511, %v616
        %v618 = vsel %vm601, %v525, %v617
        %v619 = vsel %vm603, %v539, %v618
        %v620 = vsel %vm605, %v553, %v619
        %v621 = vsel %vm593, %v476, %v462
        %v622 = vsel %vm595, %v490, %v621
        %v623 = vsel %vm597, %v504, %v622
        %v624 = vsel %vm599, %v518, %v623
        %v625 = vsel %vm601, %v532, %v624
        %v626 = vsel %vm603, %v546, %v625
        %v627 = vsel %vm605, %v560, %v626
        %v632 = vadd.f32 %v237, %v606
        %v633 = vadd.f32 %v238, %v613
        %v634 = vadd.f32 %v239, %v620
        %v635 = vadd.f32 %v240, %v627
        %636 = vst [vmem:[#allocation2] sm:$0xff] %v632
        %637 = vst [vmem:[#allocation2 + $0x8] sm:$0xff] %v633
        %638 = vst [vmem:[#allocation2 + $0x10] sm:$0xff] %v634
        %639 = vst [vmem:[#allocation2 + $0x18] sm:$0xff] %v635
        // Predicated region
        $region45: #{tpu_custom_call.1} parent=31 // pred_check
          %p640 = pneg %p229
        $region46: #{tpu_custom_call.1} parent=31 // pred_check_branch
          %642 = sbr.rel (%p640) target = $region48
        $region47: #{tpu_custom_call.1} parent=31 // pred_region
          %v643 = vld [vmem:[#allocation2] sm:$0xff]
          %v644 = vld [vmem:[#allocation2 + $0x8] sm:$0xff]
          %v645 = vld [vmem:[#allocation2 + $0x10] sm:$0xff]
          %v646 = vld [vmem:[#allocation2 + $0x18] sm:$0xff]
          %v647 = vmul.f32 %v643, 0.0625
          %v648 = vmul.f32 %v644, 0.0625
          %v649 = vmul.f32 %v645, 0.0625
          %v650 = vmul.f32 %v646, 0.0625
          %v651 = vld [vmem:[#allocation6] sm:$0xff]
          %v652 = vld [vmem:[#allocation6 + $0x8] sm:$0xff]
          %v653 = vld [vmem:[#allocation6 + $0x10] sm:$0xff]
          %v654 = vld [vmem:[#allocation6 + $0x18] sm:$0xff]
          %v655 = vld [vmem:[#allocation6 + $0x20] sm:$0xff]
          %v656 = vld [vmem:[#allocation6 + $0x28] sm:$0xff]
          %v657 = vld [vmem:[#allocation6 + $0x30] sm:$0xff]
          %v658 = vld [vmem:[#allocation6 + $0x38] sm:$0xff]
          %v659 = vld [vmem:[#allocation6 + $0x40] sm:$0xff]
          %v660 = vld [vmem:[#allocation6 + $0x48] sm:$0xff]
          %v661 = vld [vmem:[#allocation6 + $0x50] sm:$0xff]
          %v662 = vld [vmem:[#allocation6 + $0x58] sm:$0xff]
          %v663 = vld [vmem:[#allocation6 + $0x60] sm:$0xff]
          %v664 = vld [vmem:[#allocation6 + $0x68] sm:$0xff]
          %v665 = vld [vmem:[#allocation6 + $0x70] sm:$0xff]
          %v666 = vld [vmem:[#allocation6 + $0x78] sm:$0xff]
          %v667 = vld [vmem:[#allocation6 + $0x80] sm:$0xff]
          %v668 = vld [vmem:[#allocation6 + $0x88] sm:$0xff]
          %v669 = vld [vmem:[#allocation6 + $0x90] sm:$0xff]
          %v670 = vld [vmem:[#allocation6 + $0x98] sm:$0xff]
          %v671 = vld [vmem:[#allocation6 + $0xa0] sm:$0xff]
          %v672 = vld [vmem:[#allocation6 + $0xa8] sm:$0xff]
          %v673 = vld [vmem:[#allocation6 + $0xb0] sm:$0xff]
          %v674 = vld [vmem:[#allocation6 + $0xb8] sm:$0xff]
          %v675 = vld [vmem:[#allocation6 + $0xc0] sm:$0xff]
          %v676 = vld [vmem:[#allocation6 + $0xc8] sm:$0xff]
          %v677 = vld [vmem:[#allocation6 + $0xd0] sm:$0xff]
          %v678 = vld [vmem:[#allocation6 + $0xd8] sm:$0xff]
          %v679 = vld [vmem:[#allocation6 + $0xe0] sm:$0xff]
          %v680 = vld [vmem:[#allocation6 + $0xe8] sm:$0xff]
          %v681 = vld [vmem:[#allocation6 + $0xf0] sm:$0xff]
          %v682 = vld [vmem:[#allocation6 + $0xf8] sm:$0xff]
          %v683 = vld [vmem:[%s2] sm:$0x1]
          %v685 = vperm.slane %v683, 0
          %687 = vmatpush.msra.mxu0 %v666
          %688 = vmatpush.msra.mxu0 %v665
          %689 = vmatpush.msra.mxu0 %v664
          %690 = vmatpush.msra.mxu0 %v663
          %691 = vmatpush.msra.mxu0 %v662
          %692 = vmatpush.msra.mxu0 %v661
          %693 = vmatpush.msra.mxu0 %v660
          %694 = vmatpush.msra.mxu0 %v659
          %695 = vmatpush.msra.mxu0 %v658
          %696 = vmatpush.msra.mxu0 %v657
          %697 = vmatpush.msra.mxu0 %v656
          %698 = vmatpush.msra.mxu0 %v655
          %699 = vmatpush.msra.mxu0 %v654
          %700 = vmatpush.msra.mxu0 %v653
          %701 = vmatpush.msra.mxu0 %v652
          %702 = vmatpush.msra.mxu0 %v651
          %703 = vmatmul.f32.gmra.mxu0 %v647
          %v704 = vpop.f32.mrf.mxu0
          %v705 = vadd.f32 %v685, %v704
          %706 = vmatmul.f32.gmra.mxu0 %v649
          %v707 = vpop.f32.mrf.mxu0
          %v708 = vadd.f32 %v685, %v707
          %709 = vdwg.mxu0
          %710 = vmatpush.msra.mxu0 %v682
          %711 = vmatpush.msra.mxu0 %v681
          %712 = vmatpush.msra.mxu0 %v680
          %713 = vmatpush.msra.mxu0 %v679
          %714 = vmatpush.msra.mxu0 %v678
          %715 = vmatpush.msra.mxu0 %v677
          %716 = vmatpush.msra.mxu0 %v676
          %717 = vmatpush.msra.mxu0 %v675
          %718 = vmatpush.msra.mxu0 %v674
          %719 = vmatpush.msra.mxu0 %v673
          %720 = vmatpush.msra.mxu0 %v672
          %721 = vmatpush.msra.mxu0 %v671
          %722 = vmatpush.msra.mxu0 %v670
          %723 = vmatpush.msra.mxu0 %v669
          %724 = vmatpush.msra.mxu0 %v668
          %725 = vmatpush.msra.mxu0 %v667
          %726 = vmatmul.f32.gmra.mxu0 %v648
          %v727 = vpop.f32.mrf.mxu0
          %v728 = vadd.f32 %v705, %v727
          %729 = vmatmul.f32.gmra.mxu0 %v650
          %v730 = vpop.f32.mrf.mxu0
          %v731 = vadd.f32 %v708, %v730
          %732 = vdwg.mxu0
          %733 = vst [vmem:[%s225] sm:$0xff] %v728
          %734 = vst [vmem:[%s225 + $0x8] sm:$0xff] %v731
        $region48: #{tpu_custom_call.1} parent=31 // pred_fallthru
          _
        %s735 = sand.u32 %s111, 1
        %s736 = scalar_lea.sflag [#allocation5], %s735
        %s737 = sand.u32 %s111, 1
        %s738 = smul.addr %s737, 16
        %s739 = scalar_lea.vmem [#allocation8], %s738
        // Predicated region
        $region49: #{tpu_custom_call.1} parent=31 // pred_check
          %p740 = pneg %p121
        $region50: #{tpu_custom_call.1} parent=31 // pred_check_branch
          %742 = sbr.rel (%p740) target = $region52
        $region51: #{tpu_custom_call.1} parent=31 // pred_region
          %s743 = smul.u32 2, %s25
          %745 = vsyncadd %s736, 0
          %s746 = smul.addr %s743, 8
          %s747 = scalar_lea.hbm %s3, %s746
          %s748 = sshll.u32 %s739, 4
          %s749 = int_to_ptr.vmem [resolvable:$true] %s748
          %s750 = sshll.u32 %s747, 4
          %s751 = int_to_ptr.hbm [resolvable:$true] %s750
          %756 = dma.vmem_to_hbm [thread:$0]  %s749, 256, %s751, %s736, 128, 128, 8
        $region52: #{tpu_custom_call.1} parent=31 // pred_fallthru
          _
      $region32: #{tpu_custom_call.1} parent=5 // pred_fallthru
        _
      %p757 = scmp.le.s32.totalorder 2, %s16
      // Predicated region
      $region53: #{tpu_custom_call.1} parent=5 // pred_check
        %p758 = pneg %p757
      $region54: #{tpu_custom_call.1} parent=5 // pred_check_branch
        %760 = sbr.rel (%p758) target = $region56
      $region55: #{tpu_custom_call.1} parent=5 // pred_region
        %s761 = ssub.s32 %s16, 2
        // Predicated region
        $region57: #{tpu_custom_call.1} parent=55 // pred_check
          %p762 = pneg %p127
        $region58: #{tpu_custom_call.1} parent=55 // pred_check_branch
          %764 = sbr.rel (%p762) target = $region60
        $region59: #{tpu_custom_call.1} parent=55 // pred_region
          %s765 = sand.u32 %s112, 1
          %s766 = scalar_lea.sflag [#allocation5], %s765
          %s767 = sand.u32 %s112, 1
          %s768 = smul.addr %s767, 16
          %s769 = scalar_lea.vmem [#allocation8], %s768
          %771 = dma.done %s766, 256
        $region60: #{tpu_custom_call.1} parent=55 // pred_fallthru
          _
      $region56: #{tpu_custom_call.1} parent=5 // pred_fallthru
        _
    $region6: #{tpu_custom_call.1} parent=1 // loop_footer
      %s20 = sadd.s32 1, %s16
    $region7: #{tpu_custom_call.1} parent=1 // loop_footer_branch
      %15 = sbr.rel target = $region3
    $region8: #{tpu_custom_call.1} parent=1 // loop_exit
      _
    %772 = vsyncpa [#allocation4], 1
    %s773 = scalar_lea.sflag [#allocation4], 1
    %774 = vsyncpa %s773, 1
    %775 = vsyncpa [#allocation7], 1
    %776 = vsyncpa [#allocation5], 1
    %s777 = scalar_lea.sflag [#allocation5], 1
    %778 = vsyncpa %s777, 1

</llo_original>
